<compile_context>
chip_gen: v7x
topology: tpu7x:2x2x1
jax: 0.10.0
libtpu: 0.0.40
codegen_flags: <defaults>
</compile_context>

<pallas_src>
import jax
import jax.numpy as jnp
from jax.experimental import pallas as pl
from jax.experimental.pallas import tpu as pltpu


def _round_up(x, m):
    return ((x + m - 1) // m) * m


def _vmem_capacity_bytes(default=64 * 1024 * 1024):
    """Generation-aware VMEM capacity (64 MiB on v7x, 128 MiB on v5e/v6e)."""
    try:
        info = pltpu.get_tpu_info()
        cap = getattr(info, "vmem_capacity_bytes", None)
        if cap:
            return int(cap)
    except Exception:
        pass
    return default


def _choose_tb(B, Lqp, Lv, Dq, Dv, in_itemsize, vmem_budget, target_rows=256):
    """Pick how many batch elements to fold per grid step.

    Aim for TB*Lqp >= target_rows (fills the MXU M-dim for the projection),
    but cap TB so the grid keeps >= ~4 steps when B allows (pipelining +
    v7x megacore sharding), and shrink until the per-step footprint --
    double-buffered blocks + weight + live in-kernel temporaries -- fits the
    VMEM budget.
    """
    tb = min(B, max(1, -(-target_rows // Lqp)))        # ceil(target / Lqp)
    tb = min(tb, max(1, B // 4))                       # keep >= ~4 grid steps

    def footprint(t):
        blk_in = t * (Lqp * Dq + Lv * Dv) * in_itemsize + t * Lv * 4   # q, v, mask
        blk_out = t * Lqp * (Dv + Lv) * 4                              # outputs, scores
        dbl = 2 * (blk_in + blk_out)                                   # double-buffered
        wgt = 2 * Dq * Dv * in_itemsize                                # weight (dbl-buf)
        tmp = t * Lqp * (2 * Dv + 3 * Lv) * 4 + t * Lv * 4             # proj/e/p/scores/bias
        return dbl + wgt + tmp

    while tb > 1 and footprint(tb) > vmem_budget:
        tb -= 1
    return tb


def _global_attention_kernel(q_ref, wt_ref, v_ref, m_ref, out_ref, scores_ref):
    TB, Lq, Dq = q_ref.shape
    Dv = wt_ref.shape[1]

    q = q_ref[...]                                        # (TB, Lq, Dq)
    w = wt_ref[...]                                       # (Dq, Dv) pre-transposed
    v = v_ref[...]                                        # (TB, Lv, Dv)

    # ---- projection: fold batch so the MXU sees M = TB*Lq rows -----------
    # (reshape only merges leading dims of sublane-aligned tiles -> layout-free)
    proj = jnp.dot(q.reshape(TB * Lq, Dq), w,
                   preferred_element_type=jnp.float32).reshape(TB, Lq, Dv)

    # ---- bilinear scores: e[b] = proj[b] @ value[b]^T ---------------------
    # Contract last dims directly (no transposed VMEM copy of value).
    # TODO(synk): for tiny Lq/Lv these per-batch contractions underfill the MXU;
    # a VPU broadcast-multiply + lane-reduce variant could replace them.
    e = jnp.einsum("bqe,bve->bqv", proj.astype(v.dtype), v,
                   preferred_element_type=jnp.float32)    # (TB, Lq, Lv) f32

    # ---- mask as additive bias (0 valid / -1e30 padding) ------------------
    bias = jnp.where(m_ref[...] > 0, jnp.float32(0.0), jnp.float32(-1e30))
    e = e + bias                                          # (TB,1,Lv) broadcasts

    # ---- softmax over Lv (f32) --------------------------------------------
    e_max = jnp.max(e, axis=-1, keepdims=True)
    p = jnp.exp(e - e_max)
    denom = jnp.sum(p, axis=-1, keepdims=True)
    r = pl.reciprocal(denom, approx=True)                 # EUP slot (cheap)
    r = r * (2.0 - denom * r)                             # one Newton step -> ~f32 exact
    scores = p * r

    # ---- weighted sum: outputs[b] = scores[b] @ value[b] -------------------
    out = jnp.einsum("bqv,bve->bqe", scores.astype(v.dtype), v,
                     preferred_element_type=jnp.float32)  # (TB, Lq, Dv)

    scores_ref[...] = scores.astype(scores_ref.dtype)
    out_ref[...] = out.astype(out_ref.dtype)


def global_attention(query, value, value_mask, weight, *, matmul_dtype=jnp.float32):
    """Pallas TPU implementation of GlobalAttention.forward.

    query:      [B, Lq, Dq] float32
    value:      [B, Lv, Dv] float32
    value_mask: [B, Lv]     int (1 = valid, 0 = pad)
    weight:     [Dv, Dq]    float32 (nn.Linear weight, no bias)
    matmul_dtype: dtype for the MXU operands (f32 exact, bf16 faster/half DMA).
    returns (outputs [B, Lq, Dv], scores [B, Lq, Lv]) in float32.
    """
    B, Lq, Dq = query.shape
    _, Lv, Dv = value.shape
    assert weight.shape == (Dv, Dq)
    assert value_mask.shape == (B, Lv)

    f32 = jnp.float32
    cdt = jnp.dtype(matmul_dtype)
    in_itemsize = cdt.itemsize

    # Cheap sublane rounding of Lq only (8 rows f32 / 16 rows bf16 packing);
    # Dq / Dv / Lv stay native -- their blocks span the full array dim.
    sublane = 8 if in_itemsize >= 4 else 16
    Lqp = _round_up(Lq, sublane)

    vmem_cap = _vmem_capacity_bytes()
    vmem_budget = vmem_cap // 2
    vmem_limit = min(int(0.75 * vmem_cap), 112 * 1024 * 1024)

    TB = _choose_tb(B, Lqp, Lv, Dq, Dv, in_itemsize, vmem_budget)
    Bp = _round_up(B, TB)

    q = query.astype(cdt)
    v = value.astype(cdt)
    wt = weight.astype(cdt).T                              # [Dq, Dv]
    m = value_mask.astype(jnp.int32)[:, None, :]           # [B, 1, Lv]

    # Minimal padding: Lq -> Lqp (query only) and B -> Bp (all per-batch inputs).
    if Lqp != Lq:
        q = jnp.pad(q, ((0, 0), (0, Lqp - Lq), (0, 0)))
    if Bp != B:
        q = jnp.pad(q, ((0, Bp - B), (0, 0), (0, 0)))
        v = jnp.pad(v, ((0, Bp - B), (0, 0), (0, 0)))
        m = jnp.pad(m, ((0, Bp - B), (0, 0), (0, 0)))      # pad mask = 0 (ignored rows)

    grid = (Bp // TB,)

    out_shape = (
        jax.ShapeDtypeStruct((Bp, Lqp, Dv), f32),          # outputs
        jax.ShapeDtypeStruct((Bp, Lqp, Lv), f32),          # scores
    )

    grid_spec = pltpu.PrefetchScalarGridSpec(
        num_scalar_prefetch=0,
        grid=grid,
        in_specs=[
            pl.BlockSpec((TB, Lqp, Dq), lambda b: (b, 0, 0)),   # query
            pl.BlockSpec((Dq, Dv), lambda b: (0, 0)),           # weight^T (shared)
            pl.BlockSpec((TB, Lv, Dv), lambda b: (b, 0, 0)),    # value
            pl.BlockSpec((TB, 1, Lv), lambda b: (b, 0, 0)),     # mask
        ],
        out_specs=[
            pl.BlockSpec((TB, Lqp, Dv), lambda b: (b, 0, 0)),   # outputs
            pl.BlockSpec((TB, Lqp, Lv), lambda b: (b, 0, 0)),   # scores
        ],
    )

    out_p, scores_p = pl.pallas_call(
        _global_attention_kernel,
        out_shape=out_shape,
        grid_spec=grid_spec,
        compiler_params=pltpu.CompilerParams(
            # Batch-block axis is independent -> megacore sharding on v7x.
            dimension_semantics=("parallel",),
            vmem_limit_bytes=vmem_limit,
        ),
    )(q, wt, v, m)

    # Strip the (small) Lq / batch padding.
    return out_p[:B, :Lq], scores_p[:B, :Lq]


def _reference(query, value, value_mask, weight):
    # Pure-JAX reference mirroring the PyTorch forward.
    proj = jnp.einsum("bqd,ed->bqe", query, weight)                # [B, Lq, Dv]
    e = jnp.einsum("bqe,bve->bqv", proj, value)                    # [B, Lq, Lv]
    mask = (value_mask > 0)[:, None, :]                            # [B, 1, Lv]
    e = jnp.where(mask, e, -jnp.inf)
    scores = jax.nn.softmax(e, axis=-1)
    outputs = jnp.einsum("bqv,bve->bqe", scores, value)
    return outputs, scores


if __name__ == "__main__":
    key = jax.random.PRNGKey(0)
    k_q, k_v, k_w = jax.random.split(key, 3)

    # Small shapes consistent with the module's forward.
    B, Lq, Lv = 2, 8, 8
    q_size, v_size = 32, 32

    query = jax.random.normal(k_q, (B, Lq, q_size), dtype=jnp.float32)
    value = jax.random.normal(k_v, (B, Lv, v_size), dtype=jnp.float32)

    # nn.Linear(query_size, value_size, bias=False) weight is [value_size, query_size].
    weight = (jax.random.normal(k_w, (v_size, q_size), dtype=jnp.float32)
              * (1.0 / jnp.sqrt(q_size)))

    # Mask: last few positions of batch element 1 are padding; batch 0 fully valid.
    value_mask = jnp.ones((B, Lv), dtype=jnp.int32)
    value_mask = value_mask.at[1, Lv - 3:].set(0)

    ref_out, ref_scores = _reference(query, value, value_mask, weight)

    # ---- exact f32 path -----------------------------------------------------
    outputs, scores = global_attention(query, value, value_mask, weight)
    outputs, scores = jax.block_until_ready((outputs, scores))
    assert jnp.allclose(outputs, ref_out, atol=1e-5, rtol=1e-5)
    assert jnp.allclose(scores, ref_scores, atol=1e-5, rtol=1e-5)
    # Masked positions must get zero attention weight.
    assert float(jnp.max(jnp.abs(scores[1, :, Lv - 3:]))) == 0.0

    # ---- bf16-MXU path (half input DMA, bf16-native MXU), relaxed tolerance --
    out_bf, scores_bf = global_attention(query, value, value_mask, weight,
                                         matmul_dtype=jnp.bfloat16)
    out_bf, scores_bf = jax.block_until_ready((out_bf, scores_bf))
    assert jnp.allclose(out_bf, ref_out, atol=5e-2, rtol=5e-2)
    assert jnp.allclose(scores_bf, ref_scores, atol=5e-2, rtol=5e-2)

    print("KERNEL_OK")
</pallas_src>

<mosaic_0001>
module attributes {stable_mosaic.version = 11 : i64} {
  func.func @_global_attention_kernel(%arg0: i32, %arg1: memref<1x8x32xf32, #tpu.memory_space<vmem>>, %arg2: memref<32x32xf32, #tpu.memory_space<vmem>>, %arg3: memref<1x8x32xf32, #tpu.memory_space<vmem>>, %arg4: memref<1x1x8xi32, #tpu.memory_space<vmem>>, %arg5: memref<1x8x32xf32, #tpu.memory_space<vmem>>, %arg6: memref<1x8x8xf32, #tpu.memory_space<vmem>>) attributes {dimension_semantics = [#tpu.dimension_semantics<parallel>], iteration_bounds = array<i64: 2>, scalar_prefetch = 0 : i64, scratch_operands = 0 : i64, tpu.core_type = #tpu.core_type<tc>, window_params = [{transform_indices = @transform_0, window_bounds = array<i64: 1, 8, 32>}, {pipeline_mode = #tpu.pipeline_mode<synchronous>, transform_indices = @transform_1, window_bounds = array<i64: 32, 32>}, {transform_indices = @transform_2, window_bounds = array<i64: 1, 8, 32>}, {transform_indices = @transform_3, window_bounds = array<i64: 1, 1, 8>}, {transform_indices = @transform_4, window_bounds = array<i64: 1, 8, 32>}, {transform_indices = @transform_5, window_bounds = array<i64: 1, 8, 8>}]} {
    %c0 = arith.constant 0 : index
    %c0_0 = arith.constant 0 : index
    %c0_1 = arith.constant 0 : index
    %0 = vector.load %arg1[%c0, %c0_0, %c0_1] : memref<1x8x32xf32, #tpu.memory_space<vmem>>, vector<1x8x32xf32>
    %c0_2 = arith.constant 0 : index
    %c0_3 = arith.constant 0 : index
    %1 = vector.load %arg2[%c0_2, %c0_3] : memref<32x32xf32, #tpu.memory_space<vmem>>, vector<32x32xf32>
    %c0_4 = arith.constant 0 : index
    %c0_5 = arith.constant 0 : index
    %c0_6 = arith.constant 0 : index
    %2 = vector.load %arg3[%c0_4, %c0_5, %c0_6] : memref<1x8x32xf32, #tpu.memory_space<vmem>>, vector<1x8x32xf32>
    %3 = vector.shape_cast %0 : vector<1x8x32xf32> to vector<8x32xf32>
    %cst = arith.constant dense<0.000000e+00> : vector<8x32xf32>
    %4 = tpu.matmul %3, %1, %cst {dimension_numbers = #tpu.dot_dimension_numbers<[1], [0], [0], [1], [0, 0, 1, 1], [], []>} : vector<8x32xf32>, vector<32x32xf32>, vector<8x32xf32> -> vector<8x32xf32>
    %5 = vector.shape_cast %4 : vector<8x32xf32> to vector<1x8x32xf32>
    "tpu.trace_start"() <{level = 10 : i32, message = "bqe,bve->bqv"}> : () -> ()
    %cst_7 = arith.constant dense<0.000000e+00> : vector<1x8x8xf32>
    %6 = tpu.matmul %5, %2, %cst_7 {dimension_numbers = #tpu.dot_dimension_numbers<[2], [2], [1], [1], [0, 0, 0, 1, 1, 1], [0], [0]>} : vector<1x8x32xf32>, vector<1x8x32xf32>, vector<1x8x8xf32> -> vector<1x8x8xf32>
    "tpu.trace_stop"() : () -> ()
    %c0_8 = arith.constant 0 : index
    %c0_9 = arith.constant 0 : index
    %c0_10 = arith.constant 0 : index
    %7 = vector.load %arg4[%c0_8, %c0_9, %c0_10] : memref<1x1x8xi32, #tpu.memory_space<vmem>>, vector<1x1x8xi32>
    %c0_i32 = arith.constant 0 : i32
    %8 = vector.broadcast %c0_i32 : i32 to vector<1x1x8xi32>
    %9 = arith.cmpi sgt, %7, %8 : vector<1x1x8xi32>
    %cst_11 = arith.constant 0.000000e+00 : f32
    %cst_12 = arith.constant -1.000000e+30 : f32
    %10 = vector.broadcast %cst_11 : f32 to vector<1x1x8xf32>
    %11 = vector.broadcast %cst_12 : f32 to vector<1x1x8xf32>
    %12 = arith.select %9, %10, %11 : vector<1x1x8xi1>, vector<1x1x8xf32>
    %13 = vector.broadcast %12 : vector<1x1x8xf32> to vector<1x8x8xf32>
    %14 = arith.addf %6, %13 : vector<1x8x8xf32>
    %cst_13 = arith.constant dense<0xFF800000> : vector<1x8xf32>
    %15 = vector.multi_reduction <maximumf>, %14, %cst_13 [2] : vector<1x8x8xf32> to vector<1x8xf32>
    %16 = vector.shape_cast %15 : vector<1x8xf32> to vector<1x8x1xf32>
    %17 = vector.broadcast %16 : vector<1x8x1xf32> to vector<1x8x8xf32>
    %18 = arith.subf %14, %17 : vector<1x8x8xf32>
    %19 = math.exp %18 : vector<1x8x8xf32>
    %cst_14 = arith.constant dense<0.000000e+00> : vector<1x8xf32>
    %20 = vector.multi_reduction <add>, %19, %cst_14 [2] : vector<1x8x8xf32> to vector<1x8xf32>
    %21 = vector.shape_cast %20 : vector<1x8xf32> to vector<1x8x1xf32>
    %22 = tpu.reciprocal %21 {approx = true} : vector<1x8x1xf32> -> vector<1x8x1xf32>
    %23 = arith.mulf %21, %22 : vector<1x8x1xf32>
    %cst_15 = arith.constant 2.000000e+00 : f32
    %24 = vector.broadcast %cst_15 : f32 to vector<1x8x1xf32>
    %25 = arith.subf %24, %23 : vector<1x8x1xf32>
    %26 = arith.mulf %22, %25 : vector<1x8x1xf32>
    %27 = vector.broadcast %26 : vector<1x8x1xf32> to vector<1x8x8xf32>
    %28 = arith.mulf %19, %27 : vector<1x8x8xf32>
    "tpu.trace_start"() <{level = 10 : i32, message = "bqv,bve->bqe"}> : () -> ()
    %cst_16 = arith.constant dense<0.000000e+00> : vector<1x8x32xf32>
    %29 = tpu.matmul %28, %2, %cst_16 {dimension_numbers = #tpu.dot_dimension_numbers<[2], [1], [1], [2], [0, 0, 0, 1, 1, 2], [0], [0]>} : vector<1x8x8xf32>, vector<1x8x32xf32>, vector<1x8x32xf32> -> vector<1x8x32xf32>
    "tpu.trace_stop"() : () -> ()
    %c0_17 = arith.constant 0 : index
    %c0_18 = arith.constant 0 : index
    %c0_19 = arith.constant 0 : index
    %30 = vector.load %arg6[%c0_17, %c0_18, %c0_19] : memref<1x8x8xf32, #tpu.memory_space<vmem>>, vector<1x8x8xf32>
    tpu.vector_store %arg6[%c0_17, %c0_18, %c0_19], %28 {strides = array<i32>} : memref<1x8x8xf32, #tpu.memory_space<vmem>>, vector<1x8x8xf32>,
    %c0_20 = arith.constant 0 : index
    %c0_21 = arith.constant 0 : index
    %c0_22 = arith.constant 0 : index
    %31 = vector.load %arg5[%c0_20, %c0_21, %c0_22] : memref<1x8x32xf32, #tpu.memory_space<vmem>>, vector<1x8x32xf32>
    tpu.vector_store %arg5[%c0_20, %c0_21, %c0_22], %29 {strides = array<i32>} : memref<1x8x32xf32, #tpu.memory_space<vmem>>, vector<1x8x32xf32>,
    return
  }
  func.func @transform_0(%arg0: i32) -> (i32, i32, i32) {
    %c0_i32 = arith.constant 0 : i32
    %c0_i32_0 = arith.constant 0 : i32
    %c0_i32_1 = arith.constant 0 : i32
    return %arg0, %c0_i32, %c0_i32_0 : i32, i32, i32
  }
  func.func @transform_1(%arg0: i32) -> (i32, i32) {
    %c0_i32 = arith.constant 0 : i32
    %c0_i32_0 = arith.constant 0 : i32
    %c0_i32_1 = arith.constant 0 : i32
    return %c0_i32, %c0_i32_0 : i32, i32
  }
  func.func @transform_2(%arg0: i32) -> (i32, i32, i32) {
    %c0_i32 = arith.constant 0 : i32
    %c0_i32_0 = arith.constant 0 : i32
    %c0_i32_1 = arith.constant 0 : i32
    return %arg0, %c0_i32, %c0_i32_0 : i32, i32, i32
  }
  func.func @transform_3(%arg0: i32) -> (i32, i32, i32) {
    %c0_i32 = arith.constant 0 : i32
    %c0_i32_0 = arith.constant 0 : i32
    %c0_i32_1 = arith.constant 0 : i32
    return %arg0, %c0_i32, %c0_i32_0 : i32, i32, i32
  }
  func.func @transform_4(%arg0: i32) -> (i32, i32, i32) {
    %c0_i32 = arith.constant 0 : i32
    %c0_i32_0 = arith.constant 0 : i32
    %c0_i32_1 = arith.constant 0 : i32
    return %arg0, %c0_i32, %c0_i32_0 : i32, i32, i32
  }
  func.func @transform_5(%arg0: i32) -> (i32, i32, i32) {
    %c0_i32 = arith.constant 0 : i32
    %c0_i32_0 = arith.constant 0 : i32
    %c0_i32_1 = arith.constant 0 : i32
    return %arg0, %c0_i32, %c0_i32_0 : i32, i32, i32
  }
}

</mosaic_0001>

<llo_original>
// kernel: tpu_custom_call.1
$region0: #{tpu_custom_call.1}
  #allocation0 [shape = 'u32[]', space=smem, size = 0x4, offset = 0x4, fixed_abs, tag = 'smem constant byte address 0x4 - core index']
  #allocation1 [shape = 'u32[144,128]{1,0:T(1,128)}', space=vmem, size = 0x12000, scoped, tag = 'internal scratch']
  %s0 = inlined_call_operand.hbm [shape: f32[2,8,32], index: 0, kind: input, shape index: {}]
  %s1 = inlined_call_operand.hbm [shape: f32[32,32], index: 1, kind: input, shape index: {}]
  %s2 = inlined_call_operand.hbm [shape: f32[2,8,32], index: 2, kind: input, shape index: {}]
  %s3 = inlined_call_operand.vmem [shape: s32[2,1,8], index: 3, kind: input, shape index: {}]
  %s4 = inlined_call_operand.hbm [shape: f32[2,8,32], index: 4, kind: output, shape index: {0}]
  %s5 = inlined_call_operand.hbm [shape: f32[2,8,8], index: 5, kind: output, shape index: {1}]
  %6 = xla_tuple %s4, %s5
  %s7 = sld [smem:[#allocation0]]
  $region69: #{tpu_custom_call.1} parent=0
    _
  %s9 = ssub.s32 1, %s7
  %s10 = scalar_select 0, %s9, %s7
  $region1: #{tpu_custom_call.1} parent=0
    #allocation2 [shape = 'u8[8192]{0}', space=vmem, size = 0x2000, scoped, tag = 'input window, operand 0']
    #allocation3 [shape = 's32[2]{0}', space=sflag, size = 0x8, scoped, tag = 'scoped memory for tpu_custom_call.1']
    #allocation4 [shape = 's32[2]{0}', space=sflag, size = 0x8, scoped, tag = 'scoped memory for tpu_custom_call.1']
    #allocation5 [shape = 'u8[16384]{0}', space=vmem, size = 0x4000, scoped, tag = 'input window, operand 1, single buffered']
    #allocation6 [shape = 's32[1]{0}', space=sflag, size = 0x4, scoped, tag = 'scoped memory for tpu_custom_call.1']
    #allocation7 [shape = 'u8[8192]{0}', space=vmem, size = 0x2000, scoped, tag = 'input window, operand 2']
    #allocation8 [shape = 'u8[8192]{0}', space=vmem, size = 0x2000, scoped, tag = 'output window, operand 0']
    #allocation9 [shape = 'u8[8192]{0}', space=vmem, size = 0x2000, scoped, tag = 'output window, operand 1']
    #allocation10 [shape = 's32[2]{0}', space=sflag, size = 0x8, scoped, tag = 'scoped memory for tpu_custom_call.1']
    %11 = vsyncpa [#allocation3], 0
    %s12 = scalar_lea.sflag [#allocation3], 1
    %13 = vsyncpa %s12, 0
    %14 = vsyncpa [#allocation6], 0
    %15 = vsyncpa [#allocation4], 0
    %s16 = scalar_lea.sflag [#allocation4], 1
    %17 = vsyncpa %s16, 0
    %18 = vsyncpa [#allocation10], 0
    %s19 = scalar_lea.sflag [#allocation10], 1
    %20 = vsyncpa %s19, 0
    loop: start=0, step=1, limit=4
    $region2: #{tpu_custom_call.1} parent=1 // loop_pre_header
      _
    $region3: #{tpu_custom_call.1} parent=1 // loop_header
      %s22 = sphi 0, %s26
      %p23 = scmp.ge.s32.totalorder %s22, 4
      %s32 = sphi 0, %s34
      %s35 = sphi 0, %s32
      %s36 = sphi 0, %s35
      %s52 = sphi 0, %s36
      %s56 = sphi 0, %s56
      %s58 = sphi 0, %s56
      %s59 = sphi 0, %s58
      %s73 = sphi 0, %s59
      %s79 = sphi 0, %s81
      %s82 = sphi 0, %s79
      %s83 = sphi 0, %s82
      %s99 = sphi 0, %s83
      %s105 = sphi 0, %s107
      %s108 = sphi 0, %s105
      %s109 = sphi 0, %s108
      %s125 = sphi 0, %s109
      %s131 = sphi 0, %s133
      %s134 = sphi 0, %s131
      %s135 = sphi 0, %s134
      %s151 = sphi 0, %s135
      %s157 = sphi 0, %s159
      %s160 = sphi 0, %s157
      %s161 = sphi 0, %s160
      %s177 = sphi 0, %s161
    $region4: #{tpu_custom_call.1} parent=1 // loop_header_branch
      %25 = sbr.rel (%p23) target = $region8
    $region5: #{tpu_custom_call.1} parent=1 // loop_body
      %s27 = ssub.s32 %s22, 1
      %s28 = ssub.s32 %s22, 2
      %s29 = sadd.s32 %s22, 1
      %s30 = ssub.s32 %s22, %s29
      %p31 = scmp.eq.s32.totalorder %s30, 0
      %s33 = sadd.s32 %s32, 1
      %s34 = scalar_select %p31, %s32, %s33
      %p37 = pneg %p31
      %p38 = scmp.eq.s32.totalorder %s22, 1
      %p39 = por %p37, %p38
      %p40 = scmp.ne.s32.totalorder %s32, %s35
      %p41 = scmp.eq.s32.totalorder %s22, 0
      %p42 = por %p40, %p41
      %p43 = scmp.ne.s32.totalorder %s32, %s35
      %p44 = scmp.eq.s32.totalorder %s27, 1
      %p45 = por %p43, %p44
      %p46 = scmp.ne.s32.totalorder %s35, %s36
      %p47 = scmp.eq.s32.totalorder %s27, 0
      %p48 = por %p46, %p47
      %p49 = scmp.ne.s32.totalorder %s35, %s36
      %p50 = scmp.eq.s32.totalorder %s28, 1
      %p51 = por %p49, %p50
      %p53 = scmp.ne.s32.totalorder %s36, %s52
      %p54 = scmp.eq.s32.totalorder %s28, 0
      %p55 = por %p53, %p54
      %s57 = sadd.s32 %s56, 1
      %p60 = scmp.eq.s32.totalorder %s22, 1
      %p61 = scmp.ne.s32.totalorder %s56, %s58
      %p62 = scmp.eq.s32.totalorder %s22, 0
      %p63 = por %p61, %p62
      %p64 = scmp.ne.s32.totalorder %s56, %s58
      %p65 = scmp.eq.s32.totalorder %s27, 1
      %p66 = por %p64, %p65
      %p67 = scmp.ne.s32.totalorder %s58, %s59
      %p68 = scmp.eq.s32.totalorder %s27, 0
      %p69 = por %p67, %p68
      %p70 = scmp.ne.s32.totalorder %s58, %s59
      %p71 = scmp.eq.s32.totalorder %s28, 1
      %p72 = por %p70, %p71
      %p74 = scmp.ne.s32.totalorder %s59, %s73
      %p75 = scmp.eq.s32.totalorder %s28, 0
      %p76 = por %p74, %p75
      %s77 = ssub.s32 %s22, %s29
      %p78 = scmp.eq.s32.totalorder %s77, 0
      %s80 = sadd.s32 %s79, 1
      %s81 = scalar_select %p78, %s79, %s80
      %p84 = pneg %p78
      %p85 = scmp.eq.s32.totalorder %s22, 1
      %p86 = por %p84, %p85
      %p87 = scmp.ne.s32.totalorder %s79, %s82
      %p88 = scmp.eq.s32.totalorder %s22, 0
      %p89 = por %p87, %p88
      %p90 = scmp.ne.s32.totalorder %s79, %s82
      %p91 = scmp.eq.s32.totalorder %s27, 1
      %p92 = por %p90, %p91
      %p93 = scmp.ne.s32.totalorder %s82, %s83
      %p94 = scmp.eq.s32.totalorder %s27, 0
      %p95 = por %p93, %p94
      %p96 = scmp.ne.s32.totalorder %s82, %s83
      %p97 = scmp.eq.s32.totalorder %s28, 1
      %p98 = por %p96, %p97
      %p100 = scmp.ne.s32.totalorder %s83, %s99
      %p101 = scmp.eq.s32.totalorder %s28, 0
      %p102 = por %p100, %p101
      %s103 = ssub.s32 %s22, %s29
      %p104 = scmp.eq.s32.totalorder %s103, 0
      %s106 = sadd.s32 %s105, 1
      %s107 = scalar_select %p104, %s105, %s106
      %p110 = pneg %p104
      %p111 = scmp.eq.s32.totalorder %s22, 1
      %p112 = por %p110, %p111
      %p113 = scmp.ne.s32.totalorder %s105, %s108
      %p114 = scmp.eq.s32.totalorder %s22, 0
      %p115 = por %p113, %p114
      %p116 = scmp.ne.s32.totalorder %s105, %s108
      %p117 = scmp.eq.s32.totalorder %s27, 1
      %p118 = por %p116, %p117
      %p119 = scmp.ne.s32.totalorder %s108, %s109
      %p120 = scmp.eq.s32.totalorder %s27, 0
      %p121 = por %p119, %p120
      %p122 = scmp.ne.s32.totalorder %s108, %s109
      %p123 = scmp.eq.s32.totalorder %s28, 1
      %p124 = por %p122, %p123
      %p126 = scmp.ne.s32.totalorder %s109, %s125
      %p127 = scmp.eq.s32.totalorder %s28, 0
      %p128 = por %p126, %p127
      %s129 = ssub.s32 %s22, %s29
      %p130 = scmp.eq.s32.totalorder %s129, 0
      %s132 = sadd.s32 %s131, 1
      %s133 = scalar_select %p130, %s131, %s132
      %p136 = pneg %p130
      %p137 = scmp.eq.s32.totalorder %s22, 1
      %p138 = por %p136, %p137
      %p139 = scmp.ne.s32.totalorder %s131, %s134
      %p140 = scmp.eq.s32.totalorder %s22, 0
      %p141 = por %p139, %p140
      %p142 = scmp.ne.s32.totalorder %s131, %s134
      %p143 = scmp.eq.s32.totalorder %s27, 1
      %p144 = por %p142, %p143
      %p145 = scmp.ne.s32.totalorder %s134, %s135
      %p146 = scmp.eq.s32.totalorder %s27, 0
      %p147 = por %p145, %p146
      %p148 = scmp.ne.s32.totalorder %s134, %s135
      %p149 = scmp.eq.s32.totalorder %s28, 1
      %p150 = por %p148, %p149
      %p152 = scmp.ne.s32.totalorder %s135, %s151
      %p153 = scmp.eq.s32.totalorder %s28, 0
      %p154 = por %p152, %p153
      %s155 = ssub.s32 %s22, %s29
      %p156 = scmp.eq.s32.totalorder %s155, 0
      %s158 = sadd.s32 %s157, 1
      %s159 = scalar_select %p156, %s157, %s158
      %p162 = pneg %p156
      %p163 = scmp.eq.s32.totalorder %s22, 1
      %p164 = por %p162, %p163
      %p165 = scmp.ne.s32.totalorder %s157, %s160
      %p166 = scmp.eq.s32.totalorder %s22, 0
      %p167 = por %p165, %p166
      %p168 = scmp.ne.s32.totalorder %s157, %s160
      %p169 = scmp.eq.s32.totalorder %s27, 1
      %p170 = por %p168, %p169
      %p171 = scmp.ne.s32.totalorder %s160, %s161
      %p172 = scmp.eq.s32.totalorder %s27, 0
      %p173 = por %p171, %p172
      %p174 = scmp.ne.s32.totalorder %s160, %s161
      %p175 = scmp.eq.s32.totalorder %s28, 1
      %p176 = por %p174, %p175
      %p178 = scmp.ne.s32.totalorder %s161, %s177
      %p179 = scmp.eq.s32.totalorder %s28, 0
      %p180 = por %p178, %p179
      %p181 = scmp.le.s32.totalorder 1, %s22
      %p182 = scmp.lt.s32.totalorder %s22, 3
      %p183 = pnand %p181, %p182
      %p184 = pneg %p183
      // Predicated region
      $region9: #{tpu_custom_call.1} parent=5 // pred_check
        _
      $region10: #{tpu_custom_call.1} parent=5 // pred_check_branch
        %186 = sbr.rel (%p183) target = $region12
      $region11: #{tpu_custom_call.1} parent=5 // pred_region
        %s187 = ssub.s32 %s22, 1
        // Predicated region
        $region13: #{tpu_custom_call.1} parent=11 // pred_check
          %p188 = pneg %p69
        $region14: #{tpu_custom_call.1} parent=11 // pred_check_branch
          %190 = sbr.rel (%p188) target = $region16
        $region15: #{tpu_custom_call.1} parent=11 // pred_region
          %s192 = ssub.s32 512, 512
          %193 = vsyncadd [#allocation6], %s192
          %s194 = sshll.u32 [#allocation5], 4
          %s195 = int_to_ptr.vmem [resolvable:$true] %s194
          %200 = dma.hbm_to_vmem [thread:$0]  %s1, 512, %s195, [#allocation6], 128, 128, 8
        $region16: #{tpu_custom_call.1} parent=11 // pred_fallthru
          _
      $region12: #{tpu_custom_call.1} parent=5 // pred_fallthru
        _
      %p201 = scmp.lt.s32.totalorder %s22, 2
      // Predicated region
      $region17: #{tpu_custom_call.1} parent=5 // pred_check
        %p202 = pneg %p201
      $region18: #{tpu_custom_call.1} parent=5 // pred_check_branch
        %204 = sbr.rel (%p202) target = $region20
      $region19: #{tpu_custom_call.1} parent=5 // pred_region
        // Predicated region
        $region21: #{tpu_custom_call.1} parent=19 // pred_check
          %p205 = pneg %p42
        $region22: #{tpu_custom_call.1} parent=19 // pred_check_branch
          %207 = sbr.rel (%p205) target = $region24
        $region23: #{tpu_custom_call.1} parent=19 // pred_region
          %s208 = sand.u32 %s22, 1
          %s209 = scalar_lea.sflag [#allocation3], %s208
          %s210 = sand.u32 %s32, 1
          %s211 = smul.addr %s210, 8
          %s212 = scalar_lea.vmem [#allocation2], %s211
          %s214 = ssub.s32 128, 128
          %215 = vsyncadd %s209, %s214
          %s216 = smul.addr %s22, 128
          %s217 = scalar_lea.hbm %s0, %s216
          %s219 = sshll.u32 %s212, 4
          %s220 = int_to_ptr.vmem [resolvable:$true] %s219
          %222 = dma.hbm_to_vmem [thread:$0]  %s217, 128, %s220, %s209
        $region24: #{tpu_custom_call.1} parent=19 // pred_fallthru
          _
        // Predicated region
        $region25: #{tpu_custom_call.1} parent=19 // pred_check
          %p223 = pneg %p89
        $region26: #{tpu_custom_call.1} parent=19 // pred_check_branch
          %225 = sbr.rel (%p223) target = $region28
        $region27: #{tpu_custom_call.1} parent=19 // pred_region
          %s226 = sand.u32 %s22, 1
          %s227 = scalar_lea.sflag [#allocation3], %s226
          %s228 = sand.u32 %s79, 1
          %s229 = smul.addr %s228, 8
          %s230 = scalar_lea.vmem [#allocation7], %s229
          %s232 = ssub.s32 128, 128
          %233 = vsyncadd %s227, %s232
          %s234 = smul.addr %s22, 128
          %s235 = scalar_lea.hbm %s2, %s234
          %s237 = sshll.u32 %s230, 4
          %s238 = int_to_ptr.vmem [resolvable:$true] %s237
          %240 = dma.hbm_to_vmem [thread:$0]  %s235, 128, %s238, %s227
        $region28: #{tpu_custom_call.1} parent=19 // pred_fallthru
          _
        // Predicated region
        $region29: #{tpu_custom_call.1} parent=19 // pred_check
          %p241 = pneg %p115
        $region30: #{tpu_custom_call.1} parent=19 // pred_check_branch
          %243 = sbr.rel (%p241) target = $region32
        $region31: #{tpu_custom_call.1} parent=19 // pred_region
          %p244 = scmp.lt.s32.totalorder %s22, 1
          %s245 = scalar_select %p244, %s22, 1
          %s246 = scalar_lea.vmem %s3, %s245
        $region32: #{tpu_custom_call.1} parent=19 // pred_fallthru
          _
      $region20: #{tpu_custom_call.1} parent=5 // pred_fallthru
        _
      %p247 = scmp.le.s32.totalorder 1, %s22
      %p248 = scmp.lt.s32.totalorder %s22, 3
      %p249 = pnand %p247, %p248
      %p250 = pneg %p249
      // Predicated region
      $region33: #{tpu_custom_call.1} parent=5 // pred_check
        _
      $region34: #{tpu_custom_call.1} parent=5 // pred_check_branch
        %252 = sbr.rel (%p249) target = $region36
      $region35: #{tpu_custom_call.1} parent=5 // pred_region
        %s253 = ssub.s32 %s22, 1
        %s254 = sand.u32 %s27, 1
        %s255 = scalar_lea.sflag [#allocation3], %s254
        %s256 = sand.u32 %s35, 1
        %s257 = smul.addr %s256, 8
        %s258 = scalar_lea.vmem [#allocation2], %s257
        // Predicated region
        $region37: #{tpu_custom_call.1} parent=35 // pred_check
          %p259 = pneg %p48
        $region38: #{tpu_custom_call.1} parent=35 // pred_check_branch
          %261 = sbr.rel (%p259) target = $region40
        $region39: #{tpu_custom_call.1} parent=35 // pred_region
          %262 = dma.done %s255, 128
        $region40: #{tpu_custom_call.1} parent=35 // pred_fallthru
          _
        // Predicated region
        $region41: #{tpu_custom_call.1} parent=35 // pred_check
          %p263 = pneg %p69
        $region42: #{tpu_custom_call.1} parent=35 // pred_check_branch
          %265 = sbr.rel (%p263) target = $region44
        $region43: #{tpu_custom_call.1} parent=35 // pred_region
          %266 = dma.done [#allocation6], 512
        $region44: #{tpu_custom_call.1} parent=35 // pred_fallthru
          _
        %s267 = sand.u32 %s27, 1
        %s268 = scalar_lea.sflag [#allocation3], %s267
        %s269 = sand.u32 %s82, 1
        %s270 = smul.addr %s269, 8
        %s271 = scalar_lea.vmem [#allocation7], %s270
        // Predicated region
        $region45: #{tpu_custom_call.1} parent=35 // pred_check
          %p272 = pneg %p95
        $region46: #{tpu_custom_call.1} parent=35 // pred_check_branch
          %274 = sbr.rel (%p272) target = $region48
        $region47: #{tpu_custom_call.1} parent=35 // pred_region
          %275 = dma.done %s268, 128
        $region48: #{tpu_custom_call.1} parent=35 // pred_fallthru
          _
        %s276 = sand.u32 %s27, 1
        %s277 = scalar_lea.sflag [#allocation3], %s276
        %s278 = sand.u32 %s35, 1
        %s279 = smul.addr %s278, 8
        %s280 = scalar_lea.vmem [#allocation2], %s279
        %p281 = pneg %p48
        %p282 = pneg %p45
        %p283 = pneg %p69
        %p284 = pneg %p66
        %s285 = sand.u32 %s27, 1
        %s286 = scalar_lea.sflag [#allocation3], %s285
        %s287 = sand.u32 %s82, 1
        %s288 = smul.addr %s287, 8
        %s289 = scalar_lea.vmem [#allocation7], %s288
        %p290 = pneg %p95
        %p291 = pneg %p92
        %p292 = scmp.lt.s32.totalorder %s27, 1
        %s293 = scalar_select %p292, %s27, 1
        %s294 = scalar_lea.vmem %s3, %s293
        %p295 = pneg %p121
        %p296 = pneg %p118
        %p297 = pneg %p147
        %p298 = pneg %p144
        %s299 = sand.u32 %s134, 1
        %s300 = scalar_lea.sflag [#allocation4], %s299
        %s301 = sand.u32 %s134, 1
        %s302 = smul.addr %s301, 8
        %s303 = scalar_lea.vmem [#allocation8], %s302
        %p304 = pneg %p173
        %p305 = pneg %p170
        %s306 = sand.u32 %s160, 1
        %s307 = scalar_lea.sflag [#allocation10], %s306
        %s308 = sand.u32 %s160, 1
        %s309 = smul.addr %s308, 8
        %s310 = scalar_lea.vmem [#allocation9], %s309
        %p311 = scmp.lt.s32.totalorder %s27, 1
        %s312 = scalar_select %p311, %s27, 1
        %s313 = scalar_lea.vmem %s3, %s312
        %v314 = vld [vmem:[%s258] sm:$0xff]
        %v315 = vld [vmem:[#allocation5] sm:$0xff]
        %v316 = vld [vmem:[#allocation5 + $0x8] sm:$0xff]
        %v317 = vld [vmem:[#allocation5 + $0x10] sm:$0xff]
        %v318 = vld [vmem:[#allocation5 + $0x18] sm:$0xff]
        %v319 = vld [vmem:[%s271] sm:$0xff]
        %vm320 = vcmask 261120
        %v322 = vsel %vm320, %v314, 0
        %324 = vmatprep.subr.mxu0 0.0
        %325 = vmatpush1.msra.mxu0 %v315
        %326 = vmatprep.subr.mxu0 0.0
        %327 = vmatpush1.msra.mxu0 %v316
        %328 = vmatprep.subr.mxu0 0.0
        %329 = vmatpush1.msra.mxu0 %v317
        %330 = vmatprep.subr.mxu0 0.0
        %331 = vmatpush1.msra.mxu0 %v318
        %332 = vmatprep.subr.mxu0 0.0
        %333 = vmatpush1.msra.mxu0 0.0
        %334 = vmatprep.subr.mxu0 0.0
        %335 = vmatpush1.msra.mxu0 0.0
        %336 = vmatprep.subr.mxu0 0.0
        %337 = vmatpush1.msra.mxu0 0.0
        %338 = vmatprep.subr.mxu0 0.0
        %339 = vmatpush1.msra.mxu0 0.0
        %340 = vmatprep.subr.mxu0 0.0
        %341 = vmatpush1.msra.mxu0 0.0
        %342 = vmatprep.subr.mxu0 0.0
        %343 = vmatpush1.msra.mxu0 0.0
        %344 = vmatprep.subr.mxu0 0.0
        %345 = vmatpush1.msra.mxu0 0.0
        %346 = vmatprep.subr.mxu0 0.0
        %347 = vmatpush1.msra.mxu0 0.0
        %348 = vmatprep.subr.mxu0 0.0
        %349 = vmatpush1.msra.mxu0 0.0
        %350 = vmatprep.subr.mxu0 0.0
        %351 = vmatpush1.msra.mxu0 0.0
        %352 = vmatprep.subr.mxu0 0.0
        %353 = vmatpush1.msra.mxu0 0.0
        %354 = vmatprep.subr.mxu0 0.0
        %355 = vmatpush1.msra.mxu0 0.0
        %356 = vmatprep.subr.mxu0 0.0
        %357 = vmatpush1.msra.mxu0 0.0
        %358 = vmatprep.subr.mxu0 0.0
        %359 = vmatpush1.msra.mxu0 0.0
        %360 = vmatprep.subr.mxu0 0.0
        %361 = vmatpush1.msra.mxu0 0.0
        %362 = vmatprep.subr.mxu0 0.0
        %363 = vmatpush1.msra.mxu0 0.0
        %364 = vmatprep.subr.mxu0 0.0
        %365 = vmatpush1.msra.mxu0 0.0
        %366 = vmatprep.subr.mxu0 0.0
        %367 = vmatpush1.msra.mxu0 0.0
        %368 = vmatprep.subr.mxu0 0.0
        %369 = vmatpush1.msra.mxu0 0.0
        %370 = vmatprep.subr.mxu0 0.0
        %371 = vmatpush1.msra.mxu0 0.0
        %372 = vmatprep.subr.mxu0 0.0
        %373 = vmatpush1.msra.mxu0 0.0
        %374 = vmatprep.subr.mxu0 0.0
        %375 = vmatpush1.msra.mxu0 0.0
        %376 = vmatprep.subr.mxu0 0.0
        %377 = vmatpush1.msra.mxu0 0.0
        %378 = vmatprep.subr.mxu0 0.0
        %379 = vmatpush1.msra.mxu0 0.0
        %380 = vmatprep.subr.mxu0 0.0
        %381 = vmatpush1.msra.mxu0 0.0
        %382 = vmatprep.subr.mxu0 0.0
        %383 = vmatpush1.msra.mxu0 0.0
        %384 = vmatprep.subr.mxu0 0.0
        %385 = vmatpush1.msra.mxu0 0.0
        %386 = vmatprep.subr.mxu0 0.0
        %387 = vmatpush1.msra.mxu0 0.0
        %388 = vmatprep.mubr.f32.mxu0 0.0
        %389 = vmatmul.mubr.f32.gmra.mrb[0].mxu0 %v322
        %v390 = vpop.f32.mrb[0].mxu0
        %v391 = vadd.f32 0.0, %v390
        %v392 = vpop.f32.mrb[0].mxu0
        %393 = vdwg.mxu0
        %v394 = vld [vmem:[%s313] sm:$0x1]
        %vm395 = vcmp.gt.s32.totalorder %v394, 0
        %v396 = vsel %vm395, 0.0, -1e+30
        %v398 = vlaneseq
        %v399 = vshrl.u32 %v398, 7
        %v400 = vsub.s32 0, %v399
        %v401 = vrot.slane %v396, %v400
        %v404 = vsel %vm320, %v391, 0
        %v407 = vsel %vm320, %v319, 0
        %409 = vmatprep.subr.mxu0 0.0
        %410 = vmatpush1.xpose.msra.mxu0 %v407
        %411 = vmatprep.subr.mxu0 0.0
        %412 = vmatpush1.xpose.msra.mxu0 0.0
        %413 = vmatprep.subr.mxu0 0.0
        %414 = vmatpush1.xpose.msra.mxu0 0.0
        %415 = vmatprep.subr.mxu0 0.0
        %416 = vmatpush1.xpose.msra.mxu0 0.0
        %417 = vmatprep.subr.mxu0 0.0
        %418 = vmatpush1.xpose.msra.mxu0 0.0
        %419 = vmatprep.subr.mxu0 0.0
        %420 = vmatpush1.xpose.msra.mxu0 0.0
        %421 = vmatprep.subr.mxu0 0.0
        %422 = vmatpush1.xpose.msra.mxu0 0.0
        %423 = vmatprep.subr.mxu0 0.0
        %424 = vmatpush1.xpose.msra.mxu0 0.0
        %425 = vmatprep.subr.mxu0 0.0
        %426 = vmatpush1.xpose.msra.mxu0 0.0
        %427 = vmatprep.subr.mxu0 0.0
        %428 = vmatpush1.xpose.msra.mxu0 0.0
        %429 = vmatprep.subr.mxu0 0.0
        %430 = vmatpush1.xpose.msra.mxu0 0.0
        %431 = vmatprep.subr.mxu0 0.0
        %432 = vmatpush1.xpose.msra.mxu0 0.0
        %433 = vmatprep.subr.mxu0 0.0
        %434 = vmatpush1.xpose.msra.mxu0 0.0
        %435 = vmatprep.subr.mxu0 0.0
        %436 = vmatpush1.xpose.msra.mxu0 0.0
        %437 = vmatprep.subr.mxu0 0.0
        %438 = vmatpush1.xpose.msra.mxu0 0.0
        %439 = vmatprep.subr.mxu0 0.0
        %440 = vmatpush1.xpose.msra.mxu0 0.0
        %441 = vmatprep.subr.mxu0 0.0
        %442 = vmatpush1.xpose.msra.mxu0 0.0
        %443 = vmatprep.subr.mxu0 0.0
        %444 = vmatpush1.xpose.msra.mxu0 0.0
        %445 = vmatprep.subr.mxu0 0.0
        %446 = vmatpush1.xpose.msra.mxu0 0.0
        %447 = vmatprep.subr.mxu0 0.0
        %448 = vmatpush1.xpose.msra.mxu0 0.0
        %449 = vmatprep.subr.mxu0 0.0
        %450 = vmatpush1.xpose.msra.mxu0 0.0
        %451 = vmatprep.subr.mxu0 0.0
        %452 = vmatpush1.xpose.msra.mxu0 0.0
        %453 = vmatprep.subr.mxu0 0.0
        %454 = vmatpush1.xpose.msra.mxu0 0.0
        %455 = vmatprep.subr.mxu0 0.0
        %456 = vmatpush1.xpose.msra.mxu0 0.0
        %457 = vmatprep.subr.mxu0 0.0
        %458 = vmatpush1.xpose.msra.mxu0 0.0
        %459 = vmatprep.subr.mxu0 0.0
        %460 = vmatpush1.xpose.msra.mxu0 0.0
        %461 = vmatprep.subr.mxu0 0.0
        %462 = vmatpush1.xpose.msra.mxu0 0.0
        %463 = vmatprep.subr.mxu0 0.0
        %464 = vmatpush1.xpose.msra.mxu0 0.0
        %465 = vmatprep.subr.mxu0 0.0
        %466 = vmatpush1.xpose.msra.mxu0 0.0
        %467 = vmatprep.subr.mxu0 0.0
        %468 = vmatpush1.xpose.msra.mxu0 0.0
        %469 = vmatprep.subr.mxu0 0.0
        %470 = vmatpush1.xpose.msra.mxu0 0.0
        %471 = vmatprep.subr.mxu0 0.0
        %472 = vmatpush1.xpose.msra.mxu0 0.0
        %473 = vmatprep.mubr.f32.mxu0 0.0
        %474 = vmatmul.mubr.f32.gmra.mrb[0].mxu0 %v404
        %v475 = vpop.f32.mrb[0].mxu0
        %v476 = vadd.f32 %v401, %v475
        %v477 = vpop.f32.mrb[0].mxu0
        %478 = vdwg.mxu0
        %vm479 = vcmask 64512
        %v480 = vsel %vm479, %v476, -inf
        %481 = vmax.xlane.f32.xlu0 %v480
        %v482 = vpop.xlane.xlu0 %481
        %v483 = vsub.f32 %v476, %v482
        %v484 = vmul.f32 %v483, 1.442695
        %v485 = vpow.pop %v484
        %v486 = vsel %vm479, %v485, 0.0
        %487 = vadd.xlane.f32.xlu0 %v486
        %v488 = vpop.xlane.xlu0 %487
        %v489 = vrcp.pop %v488
        %v490 = vmul.f32 %v488, %v489
        %v491 = vsub.f32 2.0, %v490
        %v492 = vmul.f32 %v489, %v491
        %v493 = vmul.f32 %v485, %v492
        %v495 = vsel %vm479, %v493, 0
        %497 = vmatprep.subr.mxu0 0.0
        %498 = vmatpush1.msra.mxu0 %v319
        %499 = vmatprep.subr.mxu0 0.0
        %500 = vmatpush1.msra.mxu0 0.0
        %501 = vmatprep.subr.mxu0 0.0
        %502 = vmatpush1.msra.mxu0 0.0
        %503 = vmatprep.subr.mxu0 0.0
        %504 = vmatpush1.msra.mxu0 0.0
        %505 = vmatprep.subr.mxu0 0.0
        %506 = vmatpush1.msra.mxu0 0.0
        %507 = vmatprep.subr.mxu0 0.0
        %508 = vmatpush1.msra.mxu0 0.0
        %509 = vmatprep.subr.mxu0 0.0
        %510 = vmatpush1.msra.mxu0 0.0
        %511 = vmatprep.subr.mxu0 0.0
        %512 = vmatpush1.msra.mxu0 0.0
        %513 = vmatprep.subr.mxu0 0.0
        %514 = vmatpush1.msra.mxu0 0.0
        %515 = vmatprep.subr.mxu0 0.0
        %516 = vmatpush1.msra.mxu0 0.0
        %517 = vmatprep.subr.mxu0 0.0
        %518 = vmatpush1.msra.mxu0 0.0
        %519 = vmatprep.subr.mxu0 0.0
        %520 = vmatpush1.msra.mxu0 0.0
        %521 = vmatprep.subr.mxu0 0.0
        %522 = vmatpush1.msra.mxu0 0.0
        %523 = vmatprep.subr.mxu0 0.0
        %524 = vmatpush1.msra.mxu0 0.0
        %525 = vmatprep.subr.mxu0 0.0
        %526 = vmatpush1.msra.mxu0 0.0
        %527 = vmatprep.subr.mxu0 0.0
        %528 = vmatpush1.msra.mxu0 0.0
        %529 = vmatprep.subr.mxu0 0.0
        %530 = vmatpush1.msra.mxu0 0.0
        %531 = vmatprep.subr.mxu0 0.0
        %532 = vmatpush1.msra.mxu0 0.0
        %533 = vmatprep.subr.mxu0 0.0
        %534 = vmatpush1.msra.mxu0 0.0
        %535 = vmatprep.subr.mxu0 0.0
        %536 = vmatpush1.msra.mxu0 0.0
        %537 = vmatprep.subr.mxu0 0.0
        %538 = vmatpush1.msra.mxu0 0.0
        %539 = vmatprep.subr.mxu0 0.0
        %540 = vmatpush1.msra.mxu0 0.0
        %541 = vmatprep.subr.mxu0 0.0
        %542 = vmatpush1.msra.mxu0 0.0
        %543 = vmatprep.subr.mxu0 0.0
        %544 = vmatpush1.msra.mxu0 0.0
        %545 = vmatprep.subr.mxu0 0.0
        %546 = vmatpush1.msra.mxu0 0.0
        %547 = vmatprep.subr.mxu0 0.0
        %548 = vmatpush1.msra.mxu0 0.0
        %549 = vmatprep.subr.mxu0 0.0
        %550 = vmatpush1.msra.mxu0 0.0
        %551 = vmatprep.subr.mxu0 0.0
        %552 = vmatpush1.msra.mxu0 0.0
        %553 = vmatprep.subr.mxu0 0.0
        %554 = vmatpush1.msra.mxu0 0.0
        %555 = vmatprep.subr.mxu0 0.0
        %556 = vmatpush1.msra.mxu0 0.0
        %557 = vmatprep.subr.mxu0 0.0
        %558 = vmatpush1.msra.mxu0 0.0
        %559 = vmatprep.subr.mxu0 0.0
        %560 = vmatpush1.msra.mxu0 0.0
        %561 = vmatprep.mubr.f32.mxu0 0.0
        %562 = vmatmul.mubr.f32.gmra.mrb[0].mxu0 %v495
        %v563 = vpop.f32.mrb[0].mxu0
        %v564 = vadd.f32 0.0, %v563
        %v565 = vpop.f32.mrb[0].mxu0
        %566 = vdwg.mxu0
        %567 = vst.msk [vmem:[%s310] sm:$0xff] %vm479, %v493
        %568 = vst.msk [vmem:[%s303] sm:$0xff] %vm320, %v564
        %s569 = sand.u32 %s134, 1
        %s570 = scalar_lea.sflag [#allocation4], %s569
        %s571 = sand.u32 %s134, 1
        %s572 = smul.addr %s571, 8
        %s573 = scalar_lea.vmem [#allocation8], %s572
        %s574 = sand.u32 %s160, 1
        %s575 = scalar_lea.sflag [#allocation10], %s574
        %s576 = sand.u32 %s160, 1
        %s577 = smul.addr %s576, 8
        %s578 = scalar_lea.vmem [#allocation9], %s577
        // Predicated region
        $region49: #{tpu_custom_call.1} parent=35 // pred_check
          %p579 = pneg %p144
        $region50: #{tpu_custom_call.1} parent=35 // pred_check_branch
          %581 = sbr.rel (%p579) target = $region52
        $region51: #{tpu_custom_call.1} parent=35 // pred_region
          %s583 = ssub.s32 128, 128
          %584 = vsyncadd %s570, %s583
          %s585 = smul.addr %s27, 128
          %s586 = scalar_lea.hbm %s4, %s585
          %s588 = sshll.u32 %s573, 4
          %s589 = int_to_ptr.vmem [resolvable:$true] %s588
          %591 = dma.vmem_to_hbm [thread:$0]  %s589, 128, %s586, %s570
        $region52: #{tpu_custom_call.1} parent=35 // pred_fallthru
          _
        // Predicated region
        $region53: #{tpu_custom_call.1} parent=35 // pred_check
          %p592 = pneg %p170
        $region54: #{tpu_custom_call.1} parent=35 // pred_check_branch
          %594 = sbr.rel (%p592) target = $region56
        $region55: #{tpu_custom_call.1} parent=35 // pred_region
          %s596 = ssub.s32 128, 128
          %597 = vsyncadd %s575, %s596
          %s598 = smul.addr %s27, 128
          %s599 = scalar_lea.hbm %s5, %s598
          %s601 = sshll.u32 %s578, 4
          %s602 = int_to_ptr.vmem [resolvable:$true] %s601
          %604 = dma.vmem_to_hbm [thread:$0]  %s602, 128, %s599, %s575
        $region56: #{tpu_custom_call.1} parent=35 // pred_fallthru
          _
      $region36: #{tpu_custom_call.1} parent=5 // pred_fallthru
        _
      %p605 = scmp.le.s32.totalorder 2, %s22
      // Predicated region
      $region57: #{tpu_custom_call.1} parent=5 // pred_check
        %p606 = pneg %p605
      $region58: #{tpu_custom_call.1} parent=5 // pred_check_branch
        %608 = sbr.rel (%p606) target = $region60
      $region59: #{tpu_custom_call.1} parent=5 // pred_region
        %s609 = ssub.s32 %s22, 2
        // Predicated region
        $region61: #{tpu_custom_call.1} parent=59 // pred_check
          %p610 = pneg %p150
        $region62: #{tpu_custom_call.1} parent=59 // pred_check_branch
          %612 = sbr.rel (%p610) target = $region64
        $region63: #{tpu_custom_call.1} parent=59 // pred_region
          %s613 = sand.u32 %s135, 1
          %s614 = scalar_lea.sflag [#allocation4], %s613
          %s615 = sand.u32 %s135, 1
          %s616 = smul.addr %s615, 8
          %s617 = scalar_lea.vmem [#allocation8], %s616
          %618 = dma.done %s614, 128
        $region64: #{tpu_custom_call.1} parent=59 // pred_fallthru
          _
        // Predicated region
        $region65: #{tpu_custom_call.1} parent=59 // pred_check
          %p619 = pneg %p176
        $region66: #{tpu_custom_call.1} parent=59 // pred_check_branch
          %621 = sbr.rel (%p619) target = $region68
        $region67: #{tpu_custom_call.1} parent=59 // pred_region
          %s622 = sand.u32 %s161, 1
          %s623 = scalar_lea.sflag [#allocation10], %s622
          %s624 = sand.u32 %s161, 1
          %s625 = smul.addr %s624, 8
          %s626 = scalar_lea.vmem [#allocation9], %s625
          %627 = dma.done %s623, 128
        $region68: #{tpu_custom_call.1} parent=59 // pred_fallthru
          _
      $region60: #{tpu_custom_call.1} parent=5 // pred_fallthru
        _
    $region6: #{tpu_custom_call.1} parent=1 // loop_footer
      %s26 = sadd.s32 1, %s22
    $region7: #{tpu_custom_call.1} parent=1 // loop_footer_branch
      %21 = sbr.rel target = $region3
    $region8: #{tpu_custom_call.1} parent=1 // loop_exit
      _
    %628 = vsyncpa [#allocation3], 1
    %s629 = scalar_lea.sflag [#allocation3], 1
    %630 = vsyncpa %s629, 1
    %631 = vsyncpa [#allocation6], 1
    %632 = vsyncpa [#allocation4], 1
    %s633 = scalar_lea.sflag [#allocation4], 1
    %634 = vsyncpa %s633, 1
    %635 = vsyncpa [#allocation10], 1
    %s636 = scalar_lea.sflag [#allocation10], 1
    %637 = vsyncpa %s636, 1

</llo_original>
